<compile_context>
chip_gen: v7x
topology: tpu7x:2x2x1
jax: 0.10.0
libtpu: 0.0.40
codegen_flags: <defaults>
</compile_context>

<pallas_src>
import numpy as np
import jax
import jax.numpy as jnp
from jax import lax
from jax.experimental import pallas as pl
from jax.experimental.pallas import tpu as pltpu


# ----------------------------------------------------------------------------
# small host-side helpers (static shapes / bucketing)
# ----------------------------------------------------------------------------
def _round_up(x, m):
    return ((x + m - 1) // m) * m


def _row_bucket(n):
    """Pad row count to the next power of two (>= 32) to bound recompiles and
    keep int8 second-minor block dims safe."""
    n = max(int(n), 32)
    return 1 << (n - 1).bit_length()


def _point_tiling(p, max_tile=4096):
    """Return (padded point count, point tile)."""
    if p <= max_tile:
        p_pad = _round_up(p, 128)
        return p_pad, p_pad
    return _round_up(p, max_tile), max_tile


_NEG = -1e9          # logit pad value: sigmoid -> 0, bce -> 0, dice terms -> 0
_VMEM_LIMIT = 32 * 1024 * 1024   # <=32 MiB: safe on v5e/v6e and v7x (64 MiB phys)


# ----------------------------------------------------------------------------
# Kernel 1: batched dice + sigmoid-BCE loss over [N_pad, P_pad] matched masks.
#   grid = (row tiles, point tiles)   -- point (reduction) axis last.
#   row_weights[:, 0] = 1/(B*n_b)          (dice normalisation, 0 for pad rows)
#   row_weights[:, 1] = 1/(B*n_b*P_b)      (bce  normalisation, 0 for pad rows)
# Per grid step only (tn, 128) per-lane partials are accumulated (VALU adds on
# aligned lane slices); the cross-lane reduce + weighting happens once at the
# last point tile.  Outputs are per-row-tile partial sums broadcast into a
# lane-dense (1, 8, 128) slab; the wrapper reduces element [.,0,0] over tiles.
# ----------------------------------------------------------------------------
def _mask_loss_kernel(x_ref, t_ref, w_ref, dice_ref, sigm_ref,
                      num_acc, den_acc, bce_acc):
    j = pl.program_id(1)

    @pl.when(j == 0)
    def _():
        num_acc[...] = jnp.zeros_like(num_acc)
        den_acc[...] = jnp.zeros_like(den_acc)
        bce_acc[...] = jnp.zeros_like(bce_acc)

    x = x_ref[...].astype(jnp.float32)            # [tn, tp] mask logits
    t = t_ref[...].astype(jnp.float32)            # [tn, tp] from int8 targets
    s = jax.nn.sigmoid(x)

    # BCE-with-logits reusing the sigmoid:  max(x,0) - x*t - log(s or 1-s)
    bce = jnp.maximum(x, 0.0) - x * t - jnp.log(jnp.where(x >= 0.0, s, 1.0 - s))

    tn, tp = x.shape
    nlb = tp // 128

    def lane_fold(v):
        # aligned 128-lane slices: layout-preserving, pure VALU adds, no XLU.
        out = v[:, 0:128]
        for b in range(1, nlb):
            out = out + v[:, b * 128:(b + 1) * 128]
        return out

    num_acc[...] += lane_fold(s * t)
    den_acc[...] += lane_fold(s + t)
    bce_acc[...] += lane_fold(bce)

    @pl.when(j == pl.num_programs(1) - 1)
    def _():
        w = w_ref[...].astype(jnp.float32)                        # [tn, 2]
        num = jnp.sum(num_acc[...], axis=-1, keepdims=True)       # [tn, 1]
        den = jnp.sum(den_acc[...], axis=-1, keepdims=True)
        bce_sum = jnp.sum(bce_acc[...], axis=-1, keepdims=True)
        dice = 1.0 - (2.0 * num + 1.0) / (den + 1.0)
        dice_ref[...] = jnp.full(dice_ref.shape, jnp.sum(dice * w[:, 0:1]),
                                 jnp.float32)
        sigm_ref[...] = jnp.full(sigm_ref.shape, jnp.sum(bce_sum * w[:, 1:2]),
                                 jnp.float32)


def batched_mask_losses(mask_logits, mask_targets_i8, row_weights,
                        row_tile=128, point_tile=4096):
    """mask_logits: [N_pad, P_pad] (native dtype), mask_targets_i8: int8,
    row_weights: [N_pad, 2] f32."""
    n_pad, p_pad = mask_logits.shape
    tn = min(row_tile, n_pad)
    # v7x dual-TC: ensure >=2 'parallel' row tiles whenever that keeps the
    # second-minor block dim >= 32 (int8 packing granularity).
    if n_pad // tn < 2 and n_pad >= 64:
        tn = n_pad // 2
    tp = min(point_tile, p_pad)
    assert n_pad % tn == 0 and p_pad % tp == 0 and tp % 128 == 0
    grid = (n_pad // tn, p_pad // tp)
    n_row_tiles = grid[0]

    dice_p, sigm_p = pl.pallas_call(
        _mask_loss_kernel,
        grid=grid,
        in_specs=[pl.BlockSpec((tn, tp), lambda i, j: (i, j)),
                  pl.BlockSpec((tn, tp), lambda i, j: (i, j)),
                  pl.BlockSpec((tn, 2), lambda i, j: (i, 0))],
        out_specs=[pl.BlockSpec((1, 8, 128), lambda i, j: (i, 0, 0)),
                   pl.BlockSpec((1, 8, 128), lambda i, j: (i, 0, 0))],
        out_shape=[jax.ShapeDtypeStruct((n_row_tiles, 8, 128), jnp.float32),
                   jax.ShapeDtypeStruct((n_row_tiles, 8, 128), jnp.float32)],
        scratch_shapes=[pltpu.VMEM((tn, 128), jnp.float32),
                        pltpu.VMEM((tn, 128), jnp.float32),
                        pltpu.VMEM((tn, 128), jnp.float32)],
        compiler_params=pltpu.CompilerParams(
            dimension_semantics=("parallel", "arbitrary"),
            vmem_limit_bytes=_VMEM_LIMIT),
    )(mask_logits, mask_targets_i8, row_weights)
    return jnp.sum(dice_p[:, 0, 0]), jnp.sum(sigm_p[:, 0, 0])


# ----------------------------------------------------------------------------
# Kernel 2: weighted softmax cross-entropy (loss_labels).
#   Per-row weights (empty_weight[target] * (target != ignore)) are computed
#   OUTSIDE the kernel; each tile emits (sum_i w_i*nll_i, sum_i w_i) partials.
# ----------------------------------------------------------------------------
def _weighted_ce_kernel(logits_ref, tgt_ref, wt_ref, nll_ref, wsum_ref):
    logits = logits_ref[...].astype(jnp.float32)  # [tr, C]
    tgt = tgt_ref[...]                            # [tr, 1] int32 (-1 for pad)
    wt = wt_ref[...].astype(jnp.float32)          # [tr, 1] (0 for ignore/pad)
    r, c = logits.shape

    m = jnp.max(logits, axis=-1, keepdims=True)
    lse = jnp.log(jnp.sum(jnp.exp(logits - m), axis=-1, keepdims=True)) + m

    cls = lax.broadcasted_iota(jnp.int32, (r, c), 1)
    logit_t = jnp.sum(jnp.where(cls == tgt, logits, 0.0), axis=-1,
                      keepdims=True)                               # [tr, 1]

    nll_ref[...] = jnp.full(nll_ref.shape, jnp.sum((lse - logit_t) * wt),
                            jnp.float32)
    wsum_ref[...] = jnp.full(wsum_ref.shape, jnp.sum(wt), jnp.float32)


def weighted_ce(logits2d, target_classes, row_weights, row_tile=1024):
    """logits2d: [R, C], target_classes: [R, 1] int32, row_weights: [R, 1] f32."""
    r, c = logits2d.shape
    if r <= row_tile:                 # tiny problem: single grid step
        r_pad = _round_up(r, 8)
        tr = r_pad
    else:
        r_pad = _round_up(r, row_tile)
        tr = row_tile
    if r_pad != r:
        logits2d = jnp.pad(logits2d, ((0, r_pad - r), (0, 0)))
        target_classes = jnp.pad(target_classes, ((0, r_pad - r), (0, 0)),
                                 constant_values=-1)
        row_weights = jnp.pad(row_weights, ((0, r_pad - r), (0, 0)))
    num_tiles = r_pad // tr

    nll_p, w_p = pl.pallas_call(
        _weighted_ce_kernel,
        grid=(num_tiles,),
        in_specs=[pl.BlockSpec((tr, c), lambda i: (i, 0)),
                  pl.BlockSpec((tr, 1), lambda i: (i, 0)),
                  pl.BlockSpec((tr, 1), lambda i: (i, 0))],
        out_specs=[pl.BlockSpec((1, 8, 128), lambda i: (i, 0, 0)),
                   pl.BlockSpec((1, 8, 128), lambda i: (i, 0, 0))],
        out_shape=[jax.ShapeDtypeStruct((num_tiles, 8, 128), jnp.float32),
                   jax.ShapeDtypeStruct((num_tiles, 8, 128), jnp.float32)],
        compiler_params=pltpu.CompilerParams(
            dimension_semantics=("parallel",),
            vmem_limit_bytes=_VMEM_LIMIT),
    )(logits2d, target_classes, row_weights)
    return jnp.sum(nll_p[:, 0, 0]), jnp.sum(w_p[:, 0, 0])


# ----------------------------------------------------------------------------
# SetCriterion wrapper (glue in plain JAX / numpy).
# ----------------------------------------------------------------------------
class SetCriterionPallas:
    IGNORE_INDEX = 253

    def __init__(self, num_classes, eos_coef, losses, num_points,
                 class_weights=-1):
        self.num_classes = num_classes - 1          # omit no-object class
        assert self.num_classes + 1 < self.IGNORE_INDEX, \
            "class ids must stay below ignore_index=253"
        self.eos_coef = eos_coef
        self.losses = losses
        self.num_points = num_points
        ew = np.ones(self.num_classes + 1, np.float32)
        ew[-1] = eos_coef
        if class_weights != -1:
            assert len(class_weights) == self.num_classes
            ew[:-1] = np.asarray(class_weights, np.float32)
        self._empty_weight_np = ew
        self.empty_weight = jnp.asarray(ew)

    # ---- loss_labels -------------------------------------------------------
    def loss_labels(self, outputs, targets, indices):
        src_logits = outputs['pred_logits']                        # [B, Q, C]
        B, Q, C = src_logits.shape
        tc = np.full((B, Q), self.num_classes, np.int64)           # "no-object"
        for b, (src, tgt) in enumerate(indices):
            tc[b, np.asarray(src)] = \
                np.asarray(targets[b]['labels'])[np.asarray(tgt)]
        tc = tc.reshape(B * Q)
        # per-row class-weight lookup moved OUT of the kernel (tiny gather).
        wt = np.where(tc != self.IGNORE_INDEX,
                      self._empty_weight_np[np.clip(tc, 0, C - 1)],
                      0.0).astype(np.float32)
        nll_sum, w_sum = weighted_ce(
            src_logits.reshape(B * Q, C),                          # native dtype
            jnp.asarray(tc.reshape(B * Q, 1).astype(np.int32)),
            jnp.asarray(wt.reshape(B * Q, 1)))
        return {'loss_ce': nll_sum / w_sum}

    # ---- loss_masks --------------------------------------------------------
    def loss_masks(self, outputs, targets, indices, mask_type):
        # As in the torch reference, each batch element normalises by its own
        # local num_masks (= n_b matched masks) and the batch is averaged.
        # That normalisation is carried as per-row weights so only ONE kernel
        # launch (one cached executable per bucketed shape) is needed.
        B = len(indices)
        entries = []
        for b, (map_id, target_id) in enumerate(indices):
            src = np.asarray(map_id, np.int32)
            tgt = np.asarray(target_id, np.int32)
            if len(src) == 0:
                continue     # zero matched masks -> contributes 0 (NaN guard)
            p_b = int(np.shape(outputs['pred_masks'][b])[0])
            entries.append((b, src, tgt, len(src), p_b))
        if not entries:
            zero = jnp.zeros((), jnp.float32)
            return {'loss_mask': zero, 'loss_dice': zero}

        # TODO(synk): num_points != -1 random point subsampling (randperm) of
        # the reference is not reproduced here (all points are used).
        p_pad, _ = _point_tiling(max(e[4] for e in entries))
        n_total = sum(e[3] for e in entries)
        n_pad = _row_bucket(n_total)

        logits_dtype = outputs['pred_masks'][entries[0][0]].dtype  # bf16 kept bf16
        x_all = jnp.full((n_pad, p_pad), _NEG, dtype=logits_dtype)
        t_all = jnp.zeros((n_pad, p_pad), jnp.int8)                # 1 B / elem
        w = np.zeros((n_pad, 2), np.float32)

        row = 0
        for (b, src, tgt, n_b, p_b) in entries:
            pm = outputs['pred_masks'][b]                           # [P_b, Q]
            # TODO(synk): this gather+transpose could move in-kernel via
            # PrefetchScalarGridSpec if pred_masks were produced query-major.
            x_b = jnp.take(pm, jnp.asarray(src), axis=1).T          # [n_b, P_b]
            t_b = jnp.take(jnp.asarray(targets[b][mask_type]),
                           jnp.asarray(tgt), axis=0).astype(jnp.int8)
            # single fused write into the preallocated padded buffer
            # (replaces pad + concat + re-pad HBM passes).
            x_all = lax.dynamic_update_slice(x_all, x_b.astype(logits_dtype),
                                             (row, 0))
            t_all = lax.dynamic_update_slice(t_all, t_b, (row, 0))
            w[row:row + n_b, 0] = 1.0 / (B * n_b)
            w[row:row + n_b, 1] = 1.0 / (B * n_b * p_b)
            row += n_b

        dice, sigm = batched_mask_losses(x_all, t_all, jnp.asarray(w))
        return {'loss_mask': sigm, 'loss_dice': dice}

    # ---- forward -----------------------------------------------------------
    def forward(self, outputs, targets, mask_type, indices):
        # TODO(synk): Hungarian matcher is an external module; indices must be
        # supplied (forward(indices=...) path of the reference).
        losses = {}
        for loss in self.losses:
            if loss == 'labels':
                losses.update(self.loss_labels(outputs, targets, indices))
            elif loss == 'masks':
                losses.update(self.loss_masks(outputs, targets, indices,
                                              mask_type))
            # TODO(synk): 'sdf' / 'grasps' / 'normals' heads not instantiated.
        if 'aux_outputs' in outputs:
            for i, aux in enumerate(outputs['aux_outputs']):
                for loss in self.losses:
                    if loss == 'labels':
                        d = self.loss_labels(aux, targets, indices)
                    elif loss == 'masks':
                        d = self.loss_masks(aux, targets, indices, mask_type)
                    else:
                        continue
                    losses.update({k + f'_{i}': v for k, v in d.items()})
        return losses


# ----------------------------------------------------------------------------
# Pure numpy references for verification.
# ----------------------------------------------------------------------------
def _ref_ce(logits2d, tgt, w, ignore=253):
    logits = np.asarray(logits2d, np.float64)
    t = np.asarray(tgt).reshape(-1)
    m = logits.max(-1, keepdims=True)
    lse = np.log(np.exp(logits - m).sum(-1)) + m[:, 0]
    nll = lse - logits[np.arange(len(t)), t]
    wt = np.asarray(w, np.float64).reshape(-1)[t] * (t != ignore)
    return float((nll * wt).sum() / wt.sum())


def _ref_mask(x, t):
    x = np.asarray(x, np.float64)
    t = np.asarray(t, np.float64)
    s = 1.0 / (1.0 + np.exp(-x))
    dice = 1.0 - (2.0 * (s * t).sum(-1) + 1.0) / (s.sum(-1) + t.sum(-1) + 1.0)
    bce = np.maximum(x, 0.0) - x * t + np.log1p(np.exp(-np.abs(x)))
    n = x.shape[0]
    return float(dice.sum() / n), float(bce.mean(-1).sum() / n)


if __name__ == "__main__":
    key = jax.random.PRNGKey(0)
    B, Q, P = 2, 8, 256
    num_classes = 4            # including the no-object class
    n_tgt = 3                  # ground-truth instances per batch element

    k_logits, k_masks, k_tgt = jax.random.split(key, 3)
    pred_logits = jax.random.normal(k_logits, (B, Q, num_classes), jnp.float32)
    pred_masks = [jax.random.normal(jax.random.fold_in(k_masks, b), (P, Q),
                                    jnp.float32) for b in range(B)]

    targets = []
    for b in range(B):
        kk = jax.random.fold_in(k_tgt, b)
        labels = np.arange(n_tgt, dtype=np.int32) % (num_classes - 1)
        masks = (jax.random.uniform(kk, (n_tgt, P)) > 0.5).astype(jnp.float32)
        targets.append({'labels': labels, 'masks': masks})

    # (src query index, target instance index) per batch element; unequal
    # counts exercise the per-row weighting + row padding of the batched kernel.
    indices = [([1, 4, 6], [0, 1, 2]), ([0, 5], [2, 0])]
    outputs = {'pred_logits': pred_logits, 'pred_masks': pred_masks}

    crit = SetCriterionPallas(num_classes=num_classes, eos_coef=0.1,
                              losses=['labels', 'masks'], num_points=-1)
    losses = crit.forward(outputs, targets, 'masks', indices)
    losses = {k: jax.block_until_ready(v) for k, v in losses.items()}

    # --- verify against numpy reference ---
    tc = np.full((B, Q), num_classes - 1, np.int64)
    for b, (src, tgt) in enumerate(indices):
        tc[b, np.asarray(src)] = np.asarray(targets[b]['labels'])[np.asarray(tgt)]
    ref_ce = _ref_ce(np.asarray(pred_logits).reshape(B * Q, num_classes),
                     tc.reshape(-1), crit._empty_weight_np)
    ref_dice, ref_sigm = [], []
    for b, (map_id, target_id) in enumerate(indices):
        m = np.asarray(pred_masks[b])[:, np.asarray(map_id)].T
        t = np.asarray(targets[b]['masks'])[np.asarray(target_id)]
        d, s = _ref_mask(m, t)
        ref_dice.append(d)
        ref_sigm.append(s)

    np.testing.assert_allclose(float(losses['loss_ce']), ref_ce,
                               rtol=1e-4, atol=1e-4)
    np.testing.assert_allclose(float(losses['loss_dice']), np.mean(ref_dice),
                               rtol=1e-4, atol=1e-4)
    np.testing.assert_allclose(float(losses['loss_mask']), np.mean(ref_sigm),
                               rtol=1e-4, atol=1e-4)
    print("KERNEL_OK")
</pallas_src>

<mosaic_0001>
module attributes {stable_mosaic.version = 11 : i64} {
  func.func @_weighted_ce_kernel(%arg0: i32, %arg1: memref<16x4xf32, #tpu.memory_space<vmem>>, %arg2: memref<16x1xi32, #tpu.memory_space<vmem>>, %arg3: memref<16x1xf32, #tpu.memory_space<vmem>>, %arg4: memref<1x8x128xf32, #tpu.memory_space<vmem>>, %arg5: memref<1x8x128xf32, #tpu.memory_space<vmem>>) attributes {dimension_semantics = [#tpu.dimension_semantics<parallel>], iteration_bounds = array<i64: 1>, scalar_prefetch = 0 : i64, scratch_operands = 0 : i64, tpu.core_type = #tpu.core_type<tc>, window_params = [{transform_indices = @transform_0, window_bounds = array<i64: 16, 4>}, {transform_indices = @transform_1, window_bounds = array<i64: 16, 1>}, {transform_indices = @transform_2, window_bounds = array<i64: 16, 1>}, {transform_indices = @transform_3, window_bounds = array<i64: 1, 8, 128>}, {transform_indices = @transform_4, window_bounds = array<i64: 1, 8, 128>}]} {
    %c0 = arith.constant 0 : index
    %c0_0 = arith.constant 0 : index
    %0 = vector.load %arg1[%c0, %c0_0] : memref<16x4xf32, #tpu.memory_space<vmem>>, vector<16x4xf32>
    %c0_1 = arith.constant 0 : index
    %c0_2 = arith.constant 0 : index
    %1 = vector.load %arg2[%c0_1, %c0_2] : memref<16x1xi32, #tpu.memory_space<vmem>>, vector<16x1xi32>
    %c0_3 = arith.constant 0 : index
    %c0_4 = arith.constant 0 : index
    %2 = vector.load %arg3[%c0_3, %c0_4] : memref<16x1xf32, #tpu.memory_space<vmem>>, vector<16x1xf32>
    %cst = arith.constant dense<0xFF800000> : vector<16xf32>
    %3 = vector.multi_reduction <maximumf>, %0, %cst [1] : vector<16x4xf32> to vector<16xf32>
    %4 = vector.shape_cast %3 : vector<16xf32> to vector<16x1xf32>
    %5 = vector.broadcast %4 : vector<16x1xf32> to vector<16x4xf32>
    %6 = arith.subf %0, %5 : vector<16x4xf32>
    %7 = math.exp %6 : vector<16x4xf32>
    %cst_5 = arith.constant dense<0.000000e+00> : vector<16xf32>
    %8 = vector.multi_reduction <add>, %7, %cst_5 [1] : vector<16x4xf32> to vector<16xf32>
    %9 = vector.shape_cast %8 : vector<16xf32> to vector<16x1xf32>
    %10 = math.log %9 : vector<16x1xf32>
    %11 = arith.addf %10, %4 : vector<16x1xf32>
    %12 = tpu.iota {dimensions = array<i32: 1>} : vector<16x4xi32>
    %13 = vector.broadcast %1 : vector<16x1xi32> to vector<16x4xi32>
    %14 = arith.cmpi eq, %12, %13 : vector<16x4xi32>
    %cst_6 = arith.constant 0.000000e+00 : f32
    %15 = vector.broadcast %cst_6 : f32 to vector<16x4xf32>
    %16 = arith.select %14, %0, %15 : vector<16x4xi1>, vector<16x4xf32>
    %cst_7 = arith.constant dense<0.000000e+00> : vector<16xf32>
    %17 = vector.multi_reduction <add>, %16, %cst_7 [1] : vector<16x4xf32> to vector<16xf32>
    %18 = vector.shape_cast %17 : vector<16xf32> to vector<16x1xf32>
    %19 = arith.subf %11, %18 : vector<16x1xf32>
    %20 = arith.mulf %19, %2 : vector<16x1xf32>
    %21 = vector.shape_cast %20 : vector<16x1xf32> to vector<1x16x1xf32>
    %cst_8 = arith.constant dense<0.000000e+00> : vector<1xf32>
    %22 = vector.multi_reduction <add>, %21, %cst_8 [1, 2] : vector<1x16x1xf32> to vector<1xf32>
    %23 = vector.shape_cast %22 : vector<1xf32> to vector<1x1x1xf32>
    %24 = vector.extract %23[0, 0, 0] : f32 from vector<1x1x1xf32>
    %25 = vector.broadcast %24 : f32 to vector<1x8x128xf32>
    %c0_9 = arith.constant 0 : index
    %c0_10 = arith.constant 0 : index
    %c0_11 = arith.constant 0 : index
    %26 = vector.load %arg4[%c0_9, %c0_10, %c0_11] : memref<1x8x128xf32, #tpu.memory_space<vmem>>, vector<1x8x128xf32>
    tpu.vector_store %arg4[%c0_9, %c0_10, %c0_11], %25 {strides = array<i32>} : memref<1x8x128xf32, #tpu.memory_space<vmem>>, vector<1x8x128xf32>,
    %27 = vector.shape_cast %2 : vector<16x1xf32> to vector<1x16x1xf32>
    %cst_12 = arith.constant dense<0.000000e+00> : vector<1xf32>
    %28 = vector.multi_reduction <add>, %27, %cst_12 [1, 2] : vector<1x16x1xf32> to vector<1xf32>
    %29 = vector.shape_cast %28 : vector<1xf32> to vector<1x1x1xf32>
    %30 = vector.extract %29[0, 0, 0] : f32 from vector<1x1x1xf32>
    %31 = vector.broadcast %30 : f32 to vector<1x8x128xf32>
    %c0_13 = arith.constant 0 : index
    %c0_14 = arith.constant 0 : index
    %c0_15 = arith.constant 0 : index
    %32 = vector.load %arg5[%c0_13, %c0_14, %c0_15] : memref<1x8x128xf32, #tpu.memory_space<vmem>>, vector<1x8x128xf32>
    tpu.vector_store %arg5[%c0_13, %c0_14, %c0_15], %31 {strides = array<i32>} : memref<1x8x128xf32, #tpu.memory_space<vmem>>, vector<1x8x128xf32>,
    return
  }
  func.func @transform_0(%arg0: i32) -> (i32, i32) {
    %c0_i32 = arith.constant 0 : i32
    %c0_i32_0 = arith.constant 0 : i32
    return %arg0, %c0_i32 : i32, i32
  }
  func.func @transform_1(%arg0: i32) -> (i32, i32) {
    %c0_i32 = arith.constant 0 : i32
    %c0_i32_0 = arith.constant 0 : i32
    return %arg0, %c0_i32 : i32, i32
  }
  func.func @transform_2(%arg0: i32) -> (i32, i32) {
    %c0_i32 = arith.constant 0 : i32
    %c0_i32_0 = arith.constant 0 : i32
    return %arg0, %c0_i32 : i32, i32
  }
  func.func @transform_3(%arg0: i32) -> (i32, i32, i32) {
    %c0_i32 = arith.constant 0 : i32
    %c0_i32_0 = arith.constant 0 : i32
    %c0_i32_1 = arith.constant 0 : i32
    return %arg0, %c0_i32, %c0_i32_0 : i32, i32, i32
  }
  func.func @transform_4(%arg0: i32) -> (i32, i32, i32) {
    %c0_i32 = arith.constant 0 : i32
    %c0_i32_0 = arith.constant 0 : i32
    %c0_i32_1 = arith.constant 0 : i32
    return %arg0, %c0_i32, %c0_i32_0 : i32, i32, i32
  }
}

</mosaic_0001>

<llo_original>
// kernel: tpu_custom_call.1
$region0: #{tpu_custom_call.1}
  #allocation0 [shape = 'u32[]', space=smem, size = 0x4, offset = 0x4, fixed_abs, tag = 'smem constant byte address 0x4 - core index']
  #allocation1 [shape = 'u32[144,128]{1,0:T(1,128)}', space=vmem, size = 0x12000, scoped, tag = 'internal scratch']
  %s0 = inlined_call_operand.vmem [shape: f32[16,4], index: 0, kind: input, shape index: {}]
  %s1 = inlined_call_operand.vmem [shape: s32[16,1], index: 1, kind: input, shape index: {}]
  %s2 = inlined_call_operand.vmem [shape: f32[16,1], index: 2, kind: input, shape index: {}]
  %s3 = inlined_call_operand.hbm [shape: f32[1,8,128], index: 3, kind: output, shape index: {0}]
  %s4 = inlined_call_operand.hbm [shape: f32[1,8,128], index: 4, kind: output, shape index: {1}]
  %5 = xla_tuple %s3, %s4
  %s6 = sld [smem:[#allocation0]]
  $region30: #{tpu_custom_call.1} parent=0
    _
  %s8 = ssub.s32 1, %s6
  %s9 = scalar_select 0, %s8, %s6
  $region1: #{tpu_custom_call.1} parent=0
    #allocation2 [shape = 'u8[4096]{0}', space=vmem, size = 0x1000, scoped, tag = 'output window, operand 0, single buffered']
    #allocation3 [shape = 's32[1]{0}', space=sflag, size = 0x4, scoped, tag = 'scoped memory for tpu_custom_call.1']
    #allocation4 [shape = 'u8[4096]{0}', space=vmem, size = 0x1000, scoped, tag = 'output window, operand 1, single buffered']
    #allocation5 [shape = 's32[1]{0}', space=sflag, size = 0x4, scoped, tag = 'scoped memory for tpu_custom_call.1']
    %10 = vsyncpa [#allocation3], 0
    %11 = vsyncpa [#allocation5], 0
    // Predicated region
    $region2: #{tpu_custom_call.1} parent=1 // pred_check
      _
    $region3: #{tpu_custom_call.1} parent=1 // pred_check_branch
      %13 = sbr.rel (0) target = $region5
    $region4: #{tpu_custom_call.1} parent=1 // pred_region
      _
    $region5: #{tpu_custom_call.1} parent=1 // pred_fallthru
      _
    // Predicated region
    $region6: #{tpu_custom_call.1} parent=1 // pred_check
      _
    $region7: #{tpu_custom_call.1} parent=1 // pred_check_branch
      %15 = sbr.rel (0) target = $region9
    $region8: #{tpu_custom_call.1} parent=1 // pred_region
      _
    $region9: #{tpu_custom_call.1} parent=1 // pred_fallthru
      _
    // Predicated region
    $region10: #{tpu_custom_call.1} parent=1 // pred_check
      _
    $region11: #{tpu_custom_call.1} parent=1 // pred_check_branch
      %17 = sbr.rel (0) target = $region13
    $region12: #{tpu_custom_call.1} parent=1 // pred_region
      _
    $region13: #{tpu_custom_call.1} parent=1 // pred_fallthru
      _
    %v18 = vld [vmem:[%s0] sm:$0xff]
    %v19 = vld [vmem:[%s0 + $0x8] sm:$0xff]
    %v20 = vld [vmem:[%s1] sm:$0xff]
    %v21 = vld [vmem:[%s1 + $0x8] sm:$0xff]
    %v22 = vld [vmem:[%s2] sm:$0xff]
    %v23 = vld [vmem:[%s2 + $0x8] sm:$0xff]
    %vm24 = vcmask 31744
    %v25 = vsel %vm24, %v18, -inf
    %26 = vmax.xlane.f32.xlu0 %v25
    %v27 = vpop.xlane.xlu0 %26
    %v28 = vsel %vm24, %v19, -inf
    %29 = vmax.xlane.f32.xlu0 %v28
    %v30 = vpop.xlane.xlu0 %29
    %v31 = vsub.f32 %v18, %v27
    %v32 = vsub.f32 %v19, %v30
    %v33 = vmul.f32 %v31, 1.442695
    %v34 = vpow.pop %v33
    %v35 = vmul.f32 %v32, 1.442695
    %v36 = vpow.pop %v35
    %v37 = vsel %vm24, %v34, 0.0
    %38 = vadd.xlane.f32.xlu0 %v37
    %v39 = vpop.xlane.xlu0 %38
    %v40 = vsel %vm24, %v36, 0.0
    %41 = vadd.xlane.f32.xlu0 %v40
    %v42 = vpop.xlane.xlu0 %41
    %v43 = vlog2.pop %v39
    %v44 = vmul.f32 %v43, 0.6931472
    %v45 = vlog2.pop %v42
    %v46 = vmul.f32 %v45, 0.6931472
    %v47 = vadd.f32 %v44, %v27
    %v48 = vadd.f32 %v46, %v30
    %v49 = vlaneseq
    %v50 = vand.u32 %v49, 127
    %51 = vset.pattern.permute.xlu0 0
    %52 = vperm.xlu0 %51, %v20
    %v53 = vpop.permute.xlu0 %52
    %54 = vset.pattern.permute.xlu0 0
    %55 = vperm.xlu0 %54, %v21
    %v56 = vpop.permute.xlu0 %55
    %vm57 = vcmp.eq.s32.totalorder %v50, %v53
    %vm58 = vcmp.eq.s32.totalorder %v50, %v56
    %v59 = vsel %vm57, %v18, 0.0
    %v60 = vsel %vm58, %v19, 0.0
    %v61 = vsel %vm24, %v59, 0.0
    %62 = vadd.xlane.f32.xlu0 %v61
    %v63 = vpop.xlane.xlu0 %62
    %v64 = vsel %vm24, %v60, 0.0
    %65 = vadd.xlane.f32.xlu0 %v64
    %v66 = vpop.xlane.xlu0 %65
    %v67 = vsub.f32 %v47, %v63
    %v68 = vsub.f32 %v48, %v66
    %v69 = vmul.f32 %v67, %v22
    %v70 = vmul.f32 %v68, %v23
    %vm71 = vcmask 7168
    %v72 = vsel %vm71, %v69, 0.0
    %v73 = vsel %vm71, %v70, 0.0
    %v74 = vadd.f32 %v72, %v73
    %75 = vadd.xlane.f32.xlu0 %v74
    %v76 = vpop.xlane.xlu0 %75
    %v77 = vrot.slane %v76, 4
    %v78 = vadd.f32 %v76, %v77
    %v79 = vrot.slane %v78, 2
    %v80 = vadd.f32 %v78, %v79
    %v81 = vrot.slane %v80, 1
    %v82 = vadd.f32 %v80, %v81
    %s83 = vtos %v82
    %v84 = vstv %s83
    %85 = vst [vmem:[#allocation2] sm:$0xff] %v84
    %v86 = vsel %vm71, %v22, 0.0
    %v87 = vsel %vm71, %v23, 0.0
    %v88 = vadd.f32 %v86, %v87
    %89 = vadd.xlane.f32.xlu0 %v88
    %v90 = vpop.xlane.xlu0 %89
    %v91 = vrot.slane %v90, 4
    %v92 = vadd.f32 %v90, %v91
    %v93 = vrot.slane %v92, 2
    %v94 = vadd.f32 %v92, %v93
    %v95 = vrot.slane %v94, 1
    %v96 = vadd.f32 %v94, %v95
    %s97 = vtos %v96
    %v98 = vstv %s97
    %99 = vst [vmem:[#allocation4] sm:$0xff] %v98
    // Predicated region
    $region14: #{tpu_custom_call.1} parent=1 // pred_check
      _
    $region15: #{tpu_custom_call.1} parent=1 // pred_check_branch
      %101 = sbr.rel (0) target = $region17
    $region16: #{tpu_custom_call.1} parent=1 // pred_region
      %s103 = ssub.s32 128, 128
      %104 = vsyncadd [#allocation3], %s103
      %s106 = sshll.u32 [#allocation2], 4
      %s107 = int_to_ptr.vmem [resolvable:$true] %s106
      %109 = dma.vmem_to_hbm [thread:$0]  %s107, 128, %s3, [#allocation3]
    $region17: #{tpu_custom_call.1} parent=1 // pred_fallthru
      _
    // Predicated region
    $region18: #{tpu_custom_call.1} parent=1 // pred_check
      _
    $region19: #{tpu_custom_call.1} parent=1 // pred_check_branch
      %111 = sbr.rel (0) target = $region21
    $region20: #{tpu_custom_call.1} parent=1 // pred_region
      %s113 = ssub.s32 128, 128
      %114 = vsyncadd [#allocation5], %s113
      %s116 = sshll.u32 [#allocation4], 4
      %s117 = int_to_ptr.vmem [resolvable:$true] %s116
      %119 = dma.vmem_to_hbm [thread:$0]  %s117, 128, %s4, [#allocation5]
    $region21: #{tpu_custom_call.1} parent=1 // pred_fallthru
      _
    // Predicated region
    $region22: #{tpu_custom_call.1} parent=1 // pred_check
      _
    $region23: #{tpu_custom_call.1} parent=1 // pred_check_branch
      %121 = sbr.rel (0) target = $region25
    $region24: #{tpu_custom_call.1} parent=1 // pred_region
      %122 = dma.done [#allocation3], 128
    $region25: #{tpu_custom_call.1} parent=1 // pred_fallthru
      _
    // Predicated region
    $region26: #{tpu_custom_call.1} parent=1 // pred_check
      _
    $region27: #{tpu_custom_call.1} parent=1 // pred_check_branch
      %124 = sbr.rel (0) target = $region29
    $region28: #{tpu_custom_call.1} parent=1 // pred_region
      %125 = dma.done [#allocation5], 128
    $region29: #{tpu_custom_call.1} parent=1 // pred_fallthru
      _
    %126 = vsyncpa [#allocation3], 1
    %127 = vsyncpa [#allocation5], 1

</llo_original>
